<compile_context>
chip_gen: v7x
topology: tpu7x:2x2x1
jax: 0.10.0
libtpu: 0.0.40
codegen_flags: <defaults>
</compile_context>

<pallas_src>
import functools

import jax
import jax.numpy as jnp
from jax.experimental import pallas as pl
from jax.experimental.pallas import tpu as pltpu


def _round_up(x, m):
    return ((x + m - 1) // m) * m


def _choose_tb(batch, tb_max, want_split):
    """Batch tile: multiple of 8, as large as tb_max; when want_split (megacore
    batch-parallel mode) keep >=2 batch tiles so both v7x TensorCores get work."""
    tb_max = max(8, (tb_max // 8) * 8)
    b8 = _round_up(max(batch, 1), 8)
    tb = min(tb_max, b8)
    if want_split and b8 > 8:
        tb = min(tb, _round_up((b8 + 1) // 2, 8))
    return tb


def _choose_tv(V, tv_req=None, max_tv=8192):
    """Vocab tile (multiple of 128).  Prefer a tile that divides V exactly so the
    kernel output needs no post-kernel slice copy."""
    Vp128 = _round_up(V, 128)
    if tv_req is not None:
        tv = min(_round_up(tv_req, 128), Vp128)
    elif Vp128 <= max_tv:
        tv = Vp128                                   # single-tile fast path
    else:
        tv = None
        for cand in range(max_tv, 127, -128):        # largest 128-mult divisor
            if V % cand == 0:
                tv = cand
                break
        if tv is None:
            tv = max_tv                              # fall back to padding+slice
    Vp = _round_up(V, tv)
    # Every vocab tile must contain >=1 real column, otherwise the running max
    # stays -inf and exp(m_prev - m_new) would produce NaN.  Holds by construction.
    assert Vp - V < tv
    return tv, Vp


# ----------------------------------------------------------------------------- kernels

def _topics_fused_kernel(x_ref, wT_ref, o_ref):
    """Single vocab tile: fused Linear + in-tile log_softmax, one pass."""
    logits = jnp.dot(x_ref[...], wT_ref[...], preferred_element_type=jnp.float32)
    m = jnp.max(logits, axis=-1, keepdims=True)
    lse = m + jnp.log(jnp.sum(jnp.exp(logits - m), axis=-1, keepdims=True))
    o_ref[...] = (logits - lse).astype(o_ref.dtype)


def _topics_streamed_kernel(x_ref, wT_ref, o_ref, m_ref, l_ref, *,
                            pass_axis, vocab_axis, batch_axis):
    """Streamed vocab tiles, two passes over the vocab axis.

    pass 0: online running max / sum-exp into per-batch-tile VMEM scratch.
    pass 1: recompute the logits tile and store logits - LSE (write-once output;
            the output BlockSpec pins the block index during pass 0 so no interim
            garbage is written back to HBM).
    """
    p = pl.program_id(pass_axis)
    j = pl.program_id(vocab_axis)
    i = pl.program_id(batch_axis)

    # Bias is already folded into wT (ones column in x), so the MXU output is the
    # final logits tile.  bf16 x bf16 -> f32 accumulate.
    logits = jnp.dot(x_ref[...], wT_ref[...], preferred_element_type=jnp.float32)

    @pl.when(jnp.logical_and(p == 0, j == 0))
    def _():
        m_ref[i] = jnp.full(m_ref.shape[1:], -jnp.inf, dtype=jnp.float32)
        l_ref[i] = jnp.zeros(l_ref.shape[1:], dtype=jnp.float32)

    @pl.when(p == 0)
    def _():
        m_prev = m_ref[i]
        m_new = jnp.maximum(m_prev, jnp.max(logits, axis=-1, keepdims=True))
        l_ref[i] = (l_ref[i] * jnp.exp(m_prev - m_new)
                    + jnp.sum(jnp.exp(logits - m_new), axis=-1, keepdims=True))
        m_ref[i] = m_new

    @pl.when(jnp.logical_and(p == 1, j == 0))
    def _():
        # Hoisted LSE: fold log(l) into the running-max scratch once per batch tile.
        m_ref[i] = m_ref[i] + jnp.log(l_ref[i])

    @pl.when(p == 1)
    def _():
        o_ref[...] = (logits - m_ref[i]).astype(o_ref.dtype)


# ----------------------------------------------------------------------------- wrapper

@functools.partial(
    jax.jit,
    static_argnames=("k_in", "actual_v", "tv", "tb_max", "out_dtype",
                     "param_dtype", "batch_parallel"))
def _topics_forward_impl(logit, wT, *, k_in, actual_v, tv, tb_max, out_dtype,
                         param_dtype, batch_parallel):
    B, K = logit.shape
    assert K == k_in
    Kp, Vp = wT.shape
    assert Vp % tv == 0
    Vt = Vp // tv

    tb = _choose_tb(B, tb_max, want_split=batch_parallel)
    Bp = _round_up(B, tb)
    Bt = Bp // tb

    # Augment x with the ones column (bias folded into wT) + zero K-padding, then
    # pad the batch.  Tiny (B, Kp) op (K ~ 32); padded rows produce finite junk
    # log-probs (all-zero logits) and are sliced off below.
    xa = jnp.concatenate(
        [logit.astype(param_dtype),
         jnp.ones((B, 1), param_dtype),
         jnp.zeros((B, Kp - K - 1), param_dtype)], axis=1)
    if Bp != B:
        xa = jnp.pad(xa, ((0, Bp - B), (0, 0)))

    # Explicit scoped-VMEM budget (double-buffered output/weight/x tiles + scratch).
    out_bytes = jnp.dtype(out_dtype).itemsize
    par_bytes = jnp.dtype(param_dtype).itemsize
    est = (2 * (tb * tv * out_bytes + Kp * tv * par_bytes + tb * Kp * par_bytes)
           + 2 * Bt * tb * 4)
    vmem_limit = int(min(max(2 * est + (4 << 20), 32 << 20), 64 << 20))

    if Vt == 1:
        # Single vocab tile: one-pass fused softmax, weight fully resident.
        grid = (Bt,)
        in_specs = [pl.BlockSpec((tb, Kp), lambda i: (i, 0)),
                    pl.BlockSpec((Kp, Vp), lambda i: (0, 0))]
        out_spec = pl.BlockSpec((tb, Vp), lambda i: (i, 0))
        scratch = []
        kernel = _topics_fused_kernel
        dims = ("parallel",)
    elif batch_parallel:
        # Batch outermost + parallel (v7x megacore sharding of the batch axis).
        grid = (Bt, 2, Vt)
        in_specs = [pl.BlockSpec((tb, Kp), lambda i, p, j: (i, 0)),
                    pl.BlockSpec((Kp, tv), lambda i, p, j: (0, j))]
        # Pinned to (i, 0) during pass 0 (j*p == 0) -> no interim HBM writeback.
        out_spec = pl.BlockSpec((tb, tv), lambda i, p, j: (i, j * p))
        scratch = [pltpu.VMEM((Bt, tb, 1), jnp.float32),   # running max / LSE
                   pltpu.VMEM((Bt, tb, 1), jnp.float32)]   # running sum-exp
        kernel = functools.partial(_topics_streamed_kernel,
                                   pass_axis=1, vocab_axis=2, batch_axis=0)
        dims = ("parallel", "arbitrary", "arbitrary")
    else:
        # Batch innermost: the (Kp, tv) weight tile stays VMEM-resident across all
        # batch tiles -> weight streamed 2*Vt times total (best for v5e/v6e).
        grid = (2, Vt, Bt)
        in_specs = [pl.BlockSpec((tb, Kp), lambda p, j, i: (i, 0)),
                    pl.BlockSpec((Kp, tv), lambda p, j, i: (0, j))]
        # Pinned to block (0, 0) for all of pass 0 -> no interim HBM writeback;
        # pass 1 writes each (i, j) block exactly once.
        out_spec = pl.BlockSpec((tb, tv), lambda p, j, i: (i * p, j * p))
        scratch = [pltpu.VMEM((Bt, tb, 1), jnp.float32),
                   pltpu.VMEM((Bt, tb, 1), jnp.float32)]
        kernel = functools.partial(_topics_streamed_kernel,
                                   pass_axis=0, vocab_axis=1, batch_axis=2)
        dims = ("arbitrary", "arbitrary", "arbitrary")

    out = pl.pallas_call(
        kernel,
        out_shape=jax.ShapeDtypeStruct((Bp, Vp), out_dtype),
        grid_spec=pltpu.PrefetchScalarGridSpec(
            num_scalar_prefetch=0,
            grid=grid,
            in_specs=in_specs,
            out_specs=out_spec,
            scratch_shapes=scratch),
        compiler_params=pltpu.CompilerParams(
            dimension_semantics=dims,
            vmem_limit_bytes=vmem_limit),
    )(xa, wT)

    if Bp != B or Vp != actual_v:
        out = out[:B, :actual_v]
    return out


def make_topics(weight, bias=None, *, tv=None, tb_max=256,
                out_dtype=jnp.bfloat16, param_dtype=jnp.bfloat16,
                batch_parallel=False):
    """One-time parameter prep (do NOT call per forward).

    weight: (V, K) in PyTorch nn.Linear layout; bias: (V,) or None.
    Returns forward(logit: (B, K)) -> (B, V) log-probabilities.
    """
    weight = jnp.asarray(weight, jnp.float32)
    V, K = weight.shape
    tv_, Vp = _choose_tv(V, tv)
    Kp = _round_up(K + 1, 8)            # +1 ones column for the folded bias

    b = jnp.zeros((V,), jnp.float32) if bias is None else jnp.asarray(bias, jnp.float32)
    wT_aug = jnp.zeros((Kp, Vp), jnp.float32)
    wT_aug = wT_aug.at[:K, :V].set(weight.T)        # lane-dense (K, V)
    wT_aug = wT_aug.at[K, :V].set(b)                # bias row (rides the MXU)
    if Vp != V:
        # Padded vocab columns get a huge negative "bias": exp underflows to 0, so
        # they contribute nothing to max / LSE and are sliced off at the end.
        wT_aug = wT_aug.at[K, V:].set(-1e30)
    wT_aug = wT_aug.astype(param_dtype)

    def forward(logit):
        return _topics_forward_impl(
            logit, wT_aug, k_in=K, actual_v=V, tv=tv_, tb_max=tb_max,
            out_dtype=out_dtype, param_dtype=param_dtype,
            batch_parallel=batch_parallel)

    return forward


def reference_forward(logit, weight, bias):
    y = jnp.dot(logit, weight.T, precision=jax.lax.Precision.HIGHEST) + bias
    return jax.nn.log_softmax(y, axis=-1)


if __name__ == "__main__":
    key = jax.random.PRNGKey(0)
    kx1, kw1, kb1, kx2, kw2, kb2, kx3, kw3, kb3 = jax.random.split(key, 9)

    K = 32
    bound = 1.0 / (K ** 0.5)

    # --- Test 1: module-sized shapes (batch=8, k=32, vocab=256); single-vocab-tile
    #     fast path; f32 params/out for a tight check.
    B1, V1 = 8, 256
    w1 = jax.random.uniform(kw1, (V1, K), jnp.float32, -bound, bound)   # PyTorch (V, K)
    b1 = jax.random.uniform(kb1, (V1,), jnp.float32, -bound, bound)
    x1 = jax.random.normal(kx1, (B1, K), jnp.float32)
    f1 = make_topics(w1, b1, out_dtype=jnp.float32, param_dtype=jnp.float32)
    o1 = jax.block_until_ready(f1(x1))
    r1 = reference_forward(x1, w1, b1)
    assert o1.shape == (B1, V1)
    err1 = float(jnp.max(jnp.abs(o1.astype(jnp.float32) - r1)))
    assert err1 < 1e-2, f"test1 max abs err = {err1}"

    # --- Test 2: streamed two-pass path (3 vocab tiles of 128), 3 batch tiles
    #     (tb_max=8) with the default batch-innermost grid (weight-tile reuse),
    #     no vocab padding (tv divides V); f32 tight check.
    B2, V2 = 20, 384
    w2 = jax.random.uniform(kw2, (V2, K), jnp.float32, -bound, bound)
    b2 = jax.random.uniform(kb2, (V2,), jnp.float32, -bound, bound)
    x2 = jax.random.normal(kx2, (B2, K), jnp.float32)
    f2 = make_topics(w2, b2, tv=128, tb_max=8,
                     out_dtype=jnp.float32, param_dtype=jnp.float32)
    o2 = jax.block_until_ready(f2(x2))
    r2 = reference_forward(x2, w2, b2)
    assert o2.shape == (B2, V2)
    err2 = float(jnp.max(jnp.abs(o2.astype(jnp.float32) - r2)))
    assert err2 < 1e-2, f"test2 max abs err = {err2}"

    # --- Test 3: defaults (bf16 params + bf16 out), vocab + batch padding,
    #     batch-parallel (v7x-style) grid ordering; loose bf16 tolerance.
    B3, V3 = 20, 300
    w3 = jax.random.uniform(kw3, (V3, K), jnp.float32, -bound, bound)
    b3 = jax.random.uniform(kb3, (V3,), jnp.float32, -bound, bound)
    x3 = jax.random.normal(kx3, (B3, K), jnp.float32)
    f3 = make_topics(w3, b3, tv=128, batch_parallel=True)
    o3 = jax.block_until_ready(f3(x3))
    r3 = reference_forward(x3, w3, b3)
    assert o3.shape == (B3, V3)
    err3 = float(jnp.max(jnp.abs(o3.astype(jnp.float32) - r3)))
    assert err3 < 0.15, f"test3 max abs err = {err3}"

    print("KERNEL_OK")
</pallas_src>

<mosaic_0001>
module attributes {stable_mosaic.version = 11 : i64} {
  func.func @_topics_fused_kernel(%arg0: i32, %arg1: memref<8x40xf32, #tpu.memory_space<vmem>>, %arg2: memref<40x256xf32, #tpu.memory_space<vmem>>, %arg3: memref<8x256xf32, #tpu.memory_space<vmem>>) attributes {dimension_semantics = [#tpu.dimension_semantics<parallel>], iteration_bounds = array<i64: 1>, scalar_prefetch = 0 : i64, scratch_operands = 0 : i64, tpu.core_type = #tpu.core_type<tc>, window_params = [{transform_indices = @transform_0, window_bounds = array<i64: 8, 40>}, {pipeline_mode = #tpu.pipeline_mode<synchronous>, transform_indices = @transform_1, window_bounds = array<i64: 40, 256>}, {transform_indices = @transform_2, window_bounds = array<i64: 8, 256>}]} {
    %c0 = arith.constant 0 : index
    %c0_0 = arith.constant 0 : index
    %0 = vector.load %arg1[%c0, %c0_0] : memref<8x40xf32, #tpu.memory_space<vmem>>, vector<8x40xf32>
    %c0_1 = arith.constant 0 : index
    %c0_2 = arith.constant 0 : index
    %1 = vector.load %arg2[%c0_1, %c0_2] : memref<40x256xf32, #tpu.memory_space<vmem>>, vector<40x256xf32>
    %cst = arith.constant dense<0.000000e+00> : vector<8x256xf32>
    %2 = tpu.matmul %0, %1, %cst {dimension_numbers = #tpu.dot_dimension_numbers<[1], [0], [0], [1], [0, 0, 1, 1], [], []>} : vector<8x40xf32>, vector<40x256xf32>, vector<8x256xf32> -> vector<8x256xf32>
    %cst_3 = arith.constant dense<0xFF800000> : vector<8xf32>
    %3 = vector.multi_reduction <maximumf>, %2, %cst_3 [1] : vector<8x256xf32> to vector<8xf32>
    %4 = vector.shape_cast %3 : vector<8xf32> to vector<8x1xf32>
    %5 = vector.broadcast %4 : vector<8x1xf32> to vector<8x256xf32>
    %6 = arith.subf %2, %5 : vector<8x256xf32>
    %7 = math.exp %6 : vector<8x256xf32>
    %cst_4 = arith.constant dense<0.000000e+00> : vector<8xf32>
    %8 = vector.multi_reduction <add>, %7, %cst_4 [1] : vector<8x256xf32> to vector<8xf32>
    %9 = vector.shape_cast %8 : vector<8xf32> to vector<8x1xf32>
    %10 = math.log %9 : vector<8x1xf32>
    %11 = arith.addf %4, %10 : vector<8x1xf32>
    %12 = vector.broadcast %11 : vector<8x1xf32> to vector<8x256xf32>
    %13 = arith.subf %2, %12 : vector<8x256xf32>
    %c0_5 = arith.constant 0 : index
    %c0_6 = arith.constant 0 : index
    %14 = vector.load %arg3[%c0_5, %c0_6] : memref<8x256xf32, #tpu.memory_space<vmem>>, vector<8x256xf32>
    tpu.vector_store %arg3[%c0_5, %c0_6], %13 {strides = array<i32>} : memref<8x256xf32, #tpu.memory_space<vmem>>, vector<8x256xf32>,
    return
  }
  func.func @transform_0(%arg0: i32) -> (i32, i32) {
    %c0_i32 = arith.constant 0 : i32
    %c0_i32_0 = arith.constant 0 : i32
    return %arg0, %c0_i32 : i32, i32
  }
  func.func @transform_1(%arg0: i32) -> (i32, i32) {
    %c0_i32 = arith.constant 0 : i32
    %c0_i32_0 = arith.constant 0 : i32
    %c0_i32_1 = arith.constant 0 : i32
    return %c0_i32, %c0_i32_0 : i32, i32
  }
  func.func @transform_2(%arg0: i32) -> (i32, i32) {
    %c0_i32 = arith.constant 0 : i32
    %c0_i32_0 = arith.constant 0 : i32
    return %arg0, %c0_i32 : i32, i32
  }
}

</mosaic_0001>

<llo_original>
// kernel: _topics_forward_impl.1
$region0: #{_topics_forward_impl.1}
  #allocation0 [shape = 'u32[]', space=smem, size = 0x4, offset = 0x4, fixed_abs, tag = 'smem constant byte address 0x4 - core index']
  #allocation1 [shape = 'u32[144,128]{1,0:T(1,128)}', space=vmem, size = 0x12000, scoped, tag = 'internal scratch']
  %s0 = inlined_call_operand.vmem [shape: f32[8,40], index: 0, kind: input, shape index: {}]
  %s1 = inlined_call_operand.hbm [shape: f32[40,256], index: 1, kind: input, shape index: {}]
  %s2 = inlined_call_operand.hbm [shape: f32[8,256], index: 2, kind: output, shape index: {}]
  %s3 = sld [smem:[#allocation0]]
  $region22: #{_topics_forward_impl.1} parent=0
    _
  %s5 = ssub.s32 1, %s3
  %s6 = scalar_select 0, %s5, %s3
  $region1: #{_topics_forward_impl.1} parent=0
    #allocation2 [shape = 'u8[40960]{0}', space=vmem, size = 0xa000, scoped, tag = 'input window, operand 1, single buffered']
    #allocation3 [shape = 's32[1]{0}', space=sflag, size = 0x4, scoped, tag = 'scoped memory for _topics_forward_impl.1']
    #allocation4 [shape = 's32[1]{0}', space=sflag, size = 0x4, scoped, tag = 'scoped memory for _topics_forward_impl.1']
    #allocation5 [shape = 'u8[8192]{0}', space=vmem, size = 0x2000, scoped, tag = 'output window, operand 0, single buffered']
    %7 = vsyncpa [#allocation3], 0
    %8 = vsyncpa [#allocation4], 0
    // Predicated region
    $region2: #{_topics_forward_impl.1} parent=1 // pred_check
      _
    $region3: #{_topics_forward_impl.1} parent=1 // pred_check_branch
      %10 = sbr.rel (0) target = $region5
    $region4: #{_topics_forward_impl.1} parent=1 // pred_region
      _
    $region5: #{_topics_forward_impl.1} parent=1 // pred_fallthru
      _
    // Predicated region
    $region6: #{_topics_forward_impl.1} parent=1 // pred_check
      _
    $region7: #{_topics_forward_impl.1} parent=1 // pred_check_branch
      %12 = sbr.rel (0) target = $region9
    $region8: #{_topics_forward_impl.1} parent=1 // pred_region
      %s14 = ssub.s32 1280, 1280
      %15 = vsyncadd [#allocation3], %s14
      %s16 = sshll.u32 [#allocation2], 4
      %s17 = int_to_ptr.vmem [resolvable:$true] %s16
      %22 = dma.hbm_to_vmem [thread:$0]  %s1, 1280, %s17, [#allocation3], 256, 256, 16
    $region9: #{_topics_forward_impl.1} parent=1 // pred_fallthru
      _
    // Predicated region
    $region10: #{_topics_forward_impl.1} parent=1 // pred_check
      _
    $region11: #{_topics_forward_impl.1} parent=1 // pred_check_branch
      %24 = sbr.rel (0) target = $region13
    $region12: #{_topics_forward_impl.1} parent=1 // pred_region
      %25 = dma.done [#allocation3], 1280
    $region13: #{_topics_forward_impl.1} parent=1 // pred_fallthru
      _
    %v26 = vld [vmem:[%s0] sm:$0xff]
    %v27 = vld [vmem:[#allocation2] sm:$0xff]
    %v28 = vld [vmem:[#allocation2 + $0x8] sm:$0xff]
    %v29 = vld [vmem:[#allocation2 + $0x10] sm:$0xff]
    %v30 = vld [vmem:[#allocation2 + $0x18] sm:$0xff]
    %v31 = vld [vmem:[#allocation2 + $0x20] sm:$0xff]
    %v32 = vld [vmem:[#allocation2 + $0x28] sm:$0xff]
    %v33 = vld [vmem:[#allocation2 + $0x30] sm:$0xff]
    %v34 = vld [vmem:[#allocation2 + $0x38] sm:$0xff]
    %v35 = vld [vmem:[#allocation2 + $0x40] sm:$0xff]
    %v36 = vld [vmem:[#allocation2 + $0x48] sm:$0xff]
    %vm37 = vcmask 326656
    %v39 = vsel %vm37, %v26, 0
    %41 = vmatprep.subr.mxu0 %v28
    %42 = vmatpush1.msra.mxu0 %v27
    %43 = vmatprep.subr.mxu0 %v30
    %44 = vmatpush1.msra.mxu0 %v29
    %45 = vmatprep.subr.mxu0 %v32
    %46 = vmatpush1.msra.mxu0 %v31
    %47 = vmatprep.subr.mxu0 %v34
    %48 = vmatpush1.msra.mxu0 %v33
    %49 = vmatprep.subr.mxu0 %v36
    %50 = vmatpush1.msra.mxu0 %v35
    %51 = vmatprep.subr.mxu0 0.0
    %52 = vmatpush1.msra.mxu0 0.0
    %53 = vmatprep.subr.mxu0 0.0
    %54 = vmatpush1.msra.mxu0 0.0
    %55 = vmatprep.subr.mxu0 0.0
    %56 = vmatpush1.msra.mxu0 0.0
    %57 = vmatprep.subr.mxu0 0.0
    %58 = vmatpush1.msra.mxu0 0.0
    %59 = vmatprep.subr.mxu0 0.0
    %60 = vmatpush1.msra.mxu0 0.0
    %61 = vmatprep.subr.mxu0 0.0
    %62 = vmatpush1.msra.mxu0 0.0
    %63 = vmatprep.subr.mxu0 0.0
    %64 = vmatpush1.msra.mxu0 0.0
    %65 = vmatprep.subr.mxu0 0.0
    %66 = vmatpush1.msra.mxu0 0.0
    %67 = vmatprep.subr.mxu0 0.0
    %68 = vmatpush1.msra.mxu0 0.0
    %69 = vmatprep.subr.mxu0 0.0
    %70 = vmatpush1.msra.mxu0 0.0
    %71 = vmatprep.subr.mxu0 0.0
    %72 = vmatpush1.msra.mxu0 0.0
    %73 = vmatprep.subr.mxu0 0.0
    %74 = vmatpush1.msra.mxu0 0.0
    %75 = vmatprep.subr.mxu0 0.0
    %76 = vmatpush1.msra.mxu0 0.0
    %77 = vmatprep.subr.mxu0 0.0
    %78 = vmatpush1.msra.mxu0 0.0
    %79 = vmatprep.subr.mxu0 0.0
    %80 = vmatpush1.msra.mxu0 0.0
    %81 = vmatprep.subr.mxu0 0.0
    %82 = vmatpush1.msra.mxu0 0.0
    %83 = vmatprep.subr.mxu0 0.0
    %84 = vmatpush1.msra.mxu0 0.0
    %85 = vmatprep.subr.mxu0 0.0
    %86 = vmatpush1.msra.mxu0 0.0
    %87 = vmatprep.subr.mxu0 0.0
    %88 = vmatpush1.msra.mxu0 0.0
    %89 = vmatprep.subr.mxu0 0.0
    %90 = vmatpush1.msra.mxu0 0.0
    %91 = vmatprep.subr.mxu0 0.0
    %92 = vmatpush1.msra.mxu0 0.0
    %93 = vmatprep.subr.mxu0 0.0
    %94 = vmatpush1.msra.mxu0 0.0
    %95 = vmatprep.subr.mxu0 0.0
    %96 = vmatpush1.msra.mxu0 0.0
    %97 = vmatprep.subr.mxu0 0.0
    %98 = vmatpush1.msra.mxu0 0.0
    %99 = vmatprep.subr.mxu0 0.0
    %100 = vmatpush1.msra.mxu0 0.0
    %101 = vmatprep.subr.mxu0 0.0
    %102 = vmatpush1.msra.mxu0 0.0
    %103 = vmatprep.subr.mxu0 0.0
    %104 = vmatpush1.msra.mxu0 0.0
    %105 = vmatprep.mubr.f32.mxu0 0.0
    %106 = vmatmul.mubr.f32.gmra.mrb[0].mxu0 %v39
    %v107 = vpop.f32.mrb[0].mxu0
    %v108 = vadd.f32 0.0, %v107
    %v109 = vpop.f32.mrb[0].mxu0
    %v110 = vadd.f32 0.0, %v109
    %111 = vdwg.mxu0
    %v112 = vmax.f32 %v108, %v110
    %113 = vmax.xlane.f32.xlu0 %v112
    %v114 = vpop.xlane.xlu0 %113
    %v115 = vsub.f32 %v108, %v114
    %v116 = vsub.f32 %v110, %v114
    %v117 = vmul.f32 %v115, 1.442695
    %v118 = vpow.pop %v117
    %v119 = vmul.f32 %v116, 1.442695
    %v120 = vpow.pop %v119
    %v121 = vadd.f32 %v118, %v120
    %122 = vadd.xlane.f32.xlu0 %v121
    %v123 = vpop.xlane.xlu0 %122
    %v124 = vlog2.pop %v123
    %v125 = vmul.f32 %v124, 0.6931472
    %v126 = vadd.f32 %v114, %v125
    %v127 = vsub.f32 %v108, %v126
    %v128 = vsub.f32 %v110, %v126
    %129 = vst [vmem:[#allocation5] sm:$0xff] %v127
    %130 = vst [vmem:[#allocation5 + $0x8] sm:$0xff] %v128
    // Predicated region
    $region14: #{_topics_forward_impl.1} parent=1 // pred_check
      _
    $region15: #{_topics_forward_impl.1} parent=1 // pred_check_branch
      %132 = sbr.rel (0) target = $region17
    $region16: #{_topics_forward_impl.1} parent=1 // pred_region
      %s134 = ssub.s32 256, 256
      %135 = vsyncadd [#allocation4], %s134
      %s137 = sshll.u32 [#allocation5], 4
      %s138 = int_to_ptr.vmem [resolvable:$true] %s137
      %140 = dma.vmem_to_hbm [thread:$0]  %s138, 256, %s2, [#allocation4]
    $region17: #{_topics_forward_impl.1} parent=1 // pred_fallthru
      _
    // Predicated region
    $region18: #{_topics_forward_impl.1} parent=1 // pred_check
      _
    $region19: #{_topics_forward_impl.1} parent=1 // pred_check_branch
      %142 = sbr.rel (0) target = $region21
    $region20: #{_topics_forward_impl.1} parent=1 // pred_region
      %143 = dma.done [#allocation4], 256
    $region21: #{_topics_forward_impl.1} parent=1 // pred_fallthru
      _
    %144 = vsyncpa [#allocation3], 1
    %145 = vsyncpa [#allocation4], 1

</llo_original>
